<compile_context>
chip_gen: v6e
topology: v6e:2x2x1
jax: 0.10.0
libtpu: 0.0.40
codegen_flags: <defaults>
</compile_context>

<pallas_src>
import math

import jax
import jax.numpy as jnp
import numpy as np
from jax import lax
from jax.experimental import pallas as pl
from jax.experimental.pallas import tpu as pltpu


def _fused_attn_kernel_factory(*, batch_block, seq, ch, heads, head_dim, mxu_dtype):
    N, C, H, hd = seq, ch, heads, head_dim
    Q = N // H          # rows each head owns in PyTorch's head-mixing reshape
    md = mxu_dtype      # dtype fed to the MXU; accumulation is always f32

    def kernel(x_ref, wkqv_ref, bkqv_ref, wp_ref, bp_ref, o_ref, o1_ref):
        # x_ref:    (batch_block*N, C)  rows HOST-PERMUTED within each batch element:
        #                               local row j*Q + m holds original token m*H + j.
        # wkqv_ref: (C, 3C)  packed [k | q*scale | v] weight, (in, out) layout, mxu dtype
        # bkqv_ref: (1, 3C)  packed bias (q part pre-scaled), f32
        # wp_ref:   (C, C)   proj weight, (in, out) layout, mxu dtype
        # bp_ref:   (1, C)   proj bias, f32
        # o_ref:    (batch_block*N, C)  output rows in ORIGINAL order
        # o1_ref:   (batch_block*N, C)  f32 VMEM scratch holding out_1 in PyTorch row order
        xb = x_ref[...].astype(md)

        # Fused k/q/v projection: one MXU job, one weight stream, one bias add.
        kqv = jnp.dot(xb, wkqv_ref[...], preferred_element_type=jnp.float32)
        kqv = kqv + bkqv_ref[...]                    # f32, (batch_block*N, 3C)
        kqv_md = kqv.astype(md)                      # single cast; sliced per head below

        for b in range(batch_block):                 # static unroll: batch_block is small
            r0 = b * N
            for h in range(H):                       # static unroll: heads is small
                c0 = h * hd
                k_h = kqv_md[r0:r0 + N, c0:c0 + hd]                       # (N, hd)
                q_h = kqv_md[r0:r0 + N, C + c0:C + c0 + hd]               # pre-scaled
                v_h = kqv_md[r0:r0 + N, 2 * C + c0:2 * C + c0 + hd]       # (N, hd)

                # scores = k @ q^T (+ literal bias 0); contraction over head_dim.
                s = lax.dot_general(k_h, q_h, (((1,), (1,)), ((), ())),
                                    preferred_element_type=jnp.float32)   # (N, N)
                s = s - jnp.max(s, axis=-1, keepdims=True)
                p = jnp.exp(s)
                denom = jnp.sum(p, axis=-1, keepdims=True)                # (N, 1)

                # attn_drop(p=0.0) is identity.  Deferred softmax normalization: scale
                # the (N, hd) result once (EUP reciprocal) instead of the (N, N) matrix.
                o_h = jnp.dot(p.astype(md), v_h, preferred_element_type=jnp.float32)
                o_h = o_h * pl.reciprocal(denom, approx=True)             # (N, hd) f32

                # PyTorch head-mixing reshape: out_1[h*Q+m, j*hd:(j+1)*hd] = o_head[m*H+j, :].
                # Thanks to the host-side row permutation of x, those rows are the
                # CONTIGUOUS slice o_h[j*Q:(j+1)*Q, :]; park them in the out_1 scratch.
                for j in range(H):
                    o1_ref[r0 + h * Q:r0 + (h + 1) * Q, j * hd:(j + 1) * hd] = \
                        o_h[j * Q:(j + 1) * Q, :]

        # Single batched output projection over ALL rows of the block, then ONE store.
        out1 = o1_ref[...].astype(md)                                     # (rows, C)
        out2 = jnp.dot(out1, wp_ref[...], preferred_element_type=jnp.float32)
        o_ref[...] = (out2 + bp_ref[...]).astype(o_ref.dtype)

    return kernel


def attn_local_forward(x, _unused, params, heads, dim, *, mxu_dtype=jnp.bfloat16,
                       batch_block=None):
    """Pallas implementation of AttnLocal.forward(x, _)."""
    B, N, C = x.shape
    H = heads
    assert C % H == 0, "channels must divide evenly across heads"
    hd = C // H
    assert N % H == 0, (
        "fused kernel requires seq_len % heads == 0 (needed to express PyTorch's "
        "head-mixing reshape as contiguous row/column blocks)")
    Q = N // H

    md = jnp.dtype(mxu_dtype)
    scale = 1.0 / math.sqrt(dim)

    # ---- host-side parameter packing (one-time weight prep) --------------------
    wkqv = jnp.asarray(params["kqv_w"], jnp.float32).T            # (C, 3C)
    bkqv = jnp.asarray(params["kqv_b"], jnp.float32)              # (3C,)
    # Fold the 1/sqrt(dim) query scaling into the packed weight & bias (q columns).
    wkqv = wkqv.at[:, C:2 * C].multiply(scale)
    bkqv = bkqv.at[C:2 * C].multiply(scale)
    wkqv = wkqv.astype(md)
    bkqv = bkqv.reshape(1, 3 * C).astype(jnp.float32)
    wp = jnp.asarray(params["proj_w"], jnp.float32).T.astype(md)  # (C, C) as (in, out)
    bp = jnp.asarray(params["proj_b"], jnp.float32).reshape(1, C)

    # ---- grid sizing: amortize per-step overhead, keep v7x's 2 TCs busy ---------
    if batch_block is None:
        batch_block = max(1, min(B, max(1, 256 // N)))   # target ~256 rows per step
        if B >= 2:
            batch_block = min(batch_block, max(1, B // 2))   # >= 2 grid steps for v7x
        batch_block = min(batch_block, 16)               # bound the static unroll
    num_steps = -(-B // batch_block)                     # cdiv; no divisor collapse
    B_pad = num_steps * batch_block
    rows_per_block = batch_block * N

    # ---- host-side sequence-row permutation (makes head-mixing reshape contiguous) ----
    # x_perm[b, j*Q + m, :] = x[b, m*H + j, :].  Attention is equivariant under row
    # permutations, so per-head outputs come out with rows grouped per output column block.
    x_perm = x.reshape(B, Q, H, C).transpose(0, 2, 1, 3).reshape(B, N, C)
    if B_pad != B:
        x_perm = jnp.concatenate(
            [x_perm, jnp.zeros((B_pad - B, N, C), x_perm.dtype)], axis=0)

    # Send x over the wire in the MXU dtype (halves DMA bytes) only when the block's
    # sublane count is compatible with the packed-dtype tiling; otherwise keep f32.
    pack = max(1, 4 // md.itemsize)
    wire_dt = md if rows_per_block % (8 * pack) == 0 else jnp.float32
    x2 = x_perm.reshape(B_pad * N, C).astype(wire_dt)

    # ---- VMEM budget derived from actual buffer sizes (64 MiB cap for v7x) ------
    x_blk = rows_per_block * C * jnp.dtype(wire_dt).itemsize
    o_blk = rows_per_block * C * jnp.dtype(x.dtype).itemsize
    w_bytes = (C * 3 * C + C * C) * md.itemsize + (3 * C + C) * 4
    scratch_bytes = rows_per_block * C * 4
    live_bytes = rows_per_block * 3 * C * 4 * 2          # kqv f32 + mxu-dtype copy (upper bound)
    total = 2 * (x_blk + o_blk) + 2 * w_bytes + scratch_bytes + live_bytes
    vmem_limit = int(min(64 * 2 ** 20, max(8 * 2 ** 20, 2 * total + 4 * 2 ** 20)))

    kernel = _fused_attn_kernel_factory(batch_block=batch_block, seq=N, ch=C,
                                        heads=H, head_dim=hd, mxu_dtype=md)

    out2 = pl.pallas_call(
        kernel,
        out_shape=jax.ShapeDtypeStruct((B_pad * N, C), x.dtype),
        grid=(num_steps,),
        in_specs=[
            pl.BlockSpec((rows_per_block, C), lambda i: (i, 0)),
            pl.BlockSpec((C, 3 * C), lambda i: (0, 0)),
            pl.BlockSpec((1, 3 * C), lambda i: (0, 0)),
            pl.BlockSpec((C, C), lambda i: (0, 0)),
            pl.BlockSpec((1, C), lambda i: (0, 0)),
        ],
        out_specs=pl.BlockSpec((rows_per_block, C), lambda i: (i, 0)),
        scratch_shapes=[pltpu.VMEM((rows_per_block, C), jnp.float32)],
        compiler_params=pltpu.CompilerParams(
            dimension_semantics=("parallel",),
            vmem_limit_bytes=vmem_limit,
        ),
    )(x2, wkqv, bkqv, wp, bp)

    # proj_drop(p=0.0) is identity; drop padded batches; final torch .squeeze()
    out = out2.reshape(B_pad, N, C)[:B]
    return jnp.squeeze(out)


def attn_local_reference(x, params, heads, dim):
    """Pure-JAX mirror of the PyTorch forward for verification."""
    B, N, C = x.shape
    kqv = x @ params["kqv_w"].T + params["kqv_b"]                   # (B, N, 3C)
    kqv = kqv.reshape(B, N, 3, heads, C // heads).transpose(2, 0, 3, 1, 4)
    k, q, v = kqv[0], kqv[1], kqv[2]                                # (B, H, N, hd)
    q = q / np.sqrt(dim)
    scores = jnp.einsum("bhnd,bhmd->bhnm", k, q) + 0                # k @ q^T + bias(0)
    attn = jax.nn.softmax(scores, axis=-1)
    out_1 = jnp.einsum("bhnm,bhmd->bhnd", attn, v).reshape(B, N, C)
    out_2 = out_1 @ params["proj_w"].T + params["proj_b"]
    return jnp.squeeze(out_2)


if __name__ == "__main__":
    B, N, C = 2, 8, 32
    HEADS = 4  # window_size is stored by the module but unused in forward

    key = jax.random.PRNGKey(0)
    k1, k2, k3, k4, k5 = jax.random.split(key, 5)
    params = {
        "kqv_w": jax.random.normal(k1, (3 * C, C), jnp.float32) * 0.1,
        "kqv_b": jax.random.normal(k2, (3 * C,), jnp.float32) * 0.1,
        "proj_w": jax.random.normal(k3, (C, C), jnp.float32) * 0.1,
        "proj_b": jax.random.normal(k4, (C,), jnp.float32) * 0.1,
    }
    x = jax.random.normal(k5, (B, N, C), jnp.float32)
    dummy = None  # second forward arg is ignored by the module

    ref = attn_local_reference(x, params, HEADS, C)

    # Default path: bf16 MXU operands, f32 accumulation / softmax (looser tolerance also
    # covers the approximate EUP reciprocal used for the softmax denominator).
    out = attn_local_forward(x, dummy, params, HEADS, C)
    out = jax.block_until_ready(out)
    np.testing.assert_allclose(np.asarray(out), np.asarray(ref), rtol=5e-2, atol=5e-2)

    # Full-precision MXU operands: tight check.
    out_f32 = attn_local_forward(x, dummy, params, HEADS, C, mxu_dtype=jnp.float32)
    out_f32 = jax.block_until_ready(out_f32)
    np.testing.assert_allclose(np.asarray(out_f32), np.asarray(ref), rtol=2e-3, atol=1e-3)

    print("KERNEL_OK")
</pallas_src>

<mosaic_0001>
module attributes {stable_mosaic.version = 11 : i64} {
  func.func @kernel(%arg0: i32, %arg1: memref<8x32xf32, #tpu.memory_space<vmem>>, %arg2: memref<32x96xbf16, #tpu.memory_space<vmem>>, %arg3: memref<1x96xf32, #tpu.memory_space<vmem>>, %arg4: memref<32x32xbf16, #tpu.memory_space<vmem>>, %arg5: memref<1x32xf32, #tpu.memory_space<vmem>>, %arg6: memref<8x32xf32, #tpu.memory_space<vmem>>, %arg7: memref<8x32xf32, #tpu.memory_space<vmem>>) attributes {dimension_semantics = [#tpu.dimension_semantics<parallel>], iteration_bounds = array<i64: 2>, scalar_prefetch = 0 : i64, scratch_operands = 1 : i64, tpu.core_type = #tpu.core_type<tc>, window_params = [{transform_indices = @transform_0, window_bounds = array<i64: 8, 32>}, {pipeline_mode = #tpu.pipeline_mode<synchronous>, transform_indices = @transform_1, window_bounds = array<i64: 32, 96>}, {pipeline_mode = #tpu.pipeline_mode<synchronous>, transform_indices = @transform_2, window_bounds = array<i64: 1, 96>}, {pipeline_mode = #tpu.pipeline_mode<synchronous>, transform_indices = @transform_3, window_bounds = array<i64: 32, 32>}, {pipeline_mode = #tpu.pipeline_mode<synchronous>, transform_indices = @transform_4, window_bounds = array<i64: 1, 32>}, {transform_indices = @transform_5, window_bounds = array<i64: 8, 32>}]} {
    %c0 = arith.constant 0 : index
    %c0_0 = arith.constant 0 : index
    %0 = vector.load %arg1[%c0, %c0_0] : memref<8x32xf32, #tpu.memory_space<vmem>>, vector<8x32xf32>
    %1 = arith.truncf %0 : vector<8x32xf32> to vector<8x32xbf16>
    %c0_1 = arith.constant 0 : index
    %c0_2 = arith.constant 0 : index
    %2 = vector.load %arg2[%c0_1, %c0_2] : memref<32x96xbf16, #tpu.memory_space<vmem>>, vector<32x96xbf16>
    %cst = arith.constant dense<0.000000e+00> : vector<8x96xf32>
    %3 = tpu.matmul %1, %2, %cst {dimension_numbers = #tpu.dot_dimension_numbers<[1], [0], [0], [1], [0, 0, 1, 1], [], []>} : vector<8x32xbf16>, vector<32x96xbf16>, vector<8x96xf32> -> vector<8x96xf32>
    %c0_3 = arith.constant 0 : index
    %c0_4 = arith.constant 0 : index
    %4 = vector.load %arg3[%c0_3, %c0_4] : memref<1x96xf32, #tpu.memory_space<vmem>>, vector<1x96xf32>
    %5 = vector.broadcast %4 : vector<1x96xf32> to vector<8x96xf32>
    %6 = arith.addf %3, %5 : vector<8x96xf32>
    %7 = arith.truncf %6 : vector<8x96xf32> to vector<8x96xbf16>
    %8 = vector.extract_strided_slice %7 {offsets = [0, 0], sizes = [8, 8], strides = [1, 1]} : vector<8x96xbf16> to vector<8x8xbf16>
    %9 = vector.extract_strided_slice %7 {offsets = [0, 32], sizes = [8, 8], strides = [1, 1]} : vector<8x96xbf16> to vector<8x8xbf16>
    %10 = vector.extract_strided_slice %7 {offsets = [0, 64], sizes = [8, 8], strides = [1, 1]} : vector<8x96xbf16> to vector<8x8xbf16>
    %cst_5 = arith.constant dense<0.000000e+00> : vector<8x8xf32>
    %11 = tpu.matmul %8, %9, %cst_5 {dimension_numbers = #tpu.dot_dimension_numbers<[1], [1], [0], [0], [0, 0, 1, 0], [], []>} : vector<8x8xbf16>, vector<8x8xbf16>, vector<8x8xf32> -> vector<8x8xf32>
    %cst_6 = arith.constant dense<0xFF800000> : vector<8xf32>
    %12 = vector.multi_reduction <maximumf>, %11, %cst_6 [1] : vector<8x8xf32> to vector<8xf32>
    %13 = vector.shape_cast %12 : vector<8xf32> to vector<8x1xf32>
    %14 = vector.broadcast %13 : vector<8x1xf32> to vector<8x8xf32>
    %15 = arith.subf %11, %14 : vector<8x8xf32>
    %16 = math.exp %15 : vector<8x8xf32>
    %cst_7 = arith.constant dense<0.000000e+00> : vector<8xf32>
    %17 = vector.multi_reduction <add>, %16, %cst_7 [1] : vector<8x8xf32> to vector<8xf32>
    %18 = vector.shape_cast %17 : vector<8xf32> to vector<8x1xf32>
    %19 = arith.truncf %16 : vector<8x8xf32> to vector<8x8xbf16>
    %cst_8 = arith.constant dense<0.000000e+00> : vector<8x8xf32>
    %20 = tpu.matmul %19, %10, %cst_8 {dimension_numbers = #tpu.dot_dimension_numbers<[1], [0], [0], [1], [0, 0, 1, 1], [], []>} : vector<8x8xbf16>, vector<8x8xbf16>, vector<8x8xf32> -> vector<8x8xf32>
    %21 = tpu.reciprocal %18 {approx = true} : vector<8x1xf32> -> vector<8x1xf32>
    %22 = vector.broadcast %21 : vector<8x1xf32> to vector<8x8xf32>
    %23 = arith.mulf %20, %22 : vector<8x8xf32>
    %24 = vector.extract_strided_slice %23 {offsets = [0, 0], sizes = [2, 8], strides = [1, 1]} : vector<8x8xf32> to vector<2x8xf32>
    %c0_9 = arith.constant 0 : index
    %c0_10 = arith.constant 0 : index
    %25 = vector.load %arg7[%c0_9, %c0_10] : memref<8x32xf32, #tpu.memory_space<vmem>>, vector<2x8xf32>
    tpu.vector_store %arg7[%c0_9, %c0_10], %24 {strides = array<i32>} : memref<8x32xf32, #tpu.memory_space<vmem>>, vector<2x8xf32>,
    %26 = vector.extract_strided_slice %23 {offsets = [2, 0], sizes = [2, 8], strides = [1, 1]} : vector<8x8xf32> to vector<2x8xf32>
    %c0_11 = arith.constant 0 : index
    %c8 = arith.constant 8 : index
    %27 = vector.load %arg7[%c0_11, %c8] : memref<8x32xf32, #tpu.memory_space<vmem>>, vector<2x8xf32>
    tpu.vector_store %arg7[%c0_11, %c8], %26 {strides = array<i32>} : memref<8x32xf32, #tpu.memory_space<vmem>>, vector<2x8xf32>,
    %28 = vector.extract_strided_slice %23 {offsets = [4, 0], sizes = [2, 8], strides = [1, 1]} : vector<8x8xf32> to vector<2x8xf32>
    %c0_12 = arith.constant 0 : index
    %c16 = arith.constant 16 : index
    %29 = vector.load %arg7[%c0_12, %c16] : memref<8x32xf32, #tpu.memory_space<vmem>>, vector<2x8xf32>
    tpu.vector_store %arg7[%c0_12, %c16], %28 {strides = array<i32>} : memref<8x32xf32, #tpu.memory_space<vmem>>, vector<2x8xf32>,
    %30 = vector.extract_strided_slice %23 {offsets = [6, 0], sizes = [2, 8], strides = [1, 1]} : vector<8x8xf32> to vector<2x8xf32>
    %c0_13 = arith.constant 0 : index
    %c24 = arith.constant 24 : index
    %31 = vector.load %arg7[%c0_13, %c24] : memref<8x32xf32, #tpu.memory_space<vmem>>, vector<2x8xf32>
    tpu.vector_store %arg7[%c0_13, %c24], %30 {strides = array<i32>} : memref<8x32xf32, #tpu.memory_space<vmem>>, vector<2x8xf32>,
    %32 = vector.extract_strided_slice %7 {offsets = [0, 8], sizes = [8, 8], strides = [1, 1]} : vector<8x96xbf16> to vector<8x8xbf16>
    %33 = vector.extract_strided_slice %7 {offsets = [0, 40], sizes = [8, 8], strides = [1, 1]} : vector<8x96xbf16> to vector<8x8xbf16>
    %34 = vector.extract_strided_slice %7 {offsets = [0, 72], sizes = [8, 8], strides = [1, 1]} : vector<8x96xbf16> to vector<8x8xbf16>
    %cst_14 = arith.constant dense<0.000000e+00> : vector<8x8xf32>
    %35 = tpu.matmul %32, %33, %cst_14 {dimension_numbers = #tpu.dot_dimension_numbers<[1], [1], [0], [0], [0, 0, 1, 0], [], []>} : vector<8x8xbf16>, vector<8x8xbf16>, vector<8x8xf32> -> vector<8x8xf32>
    %cst_15 = arith.constant dense<0xFF800000> : vector<8xf32>
    %36 = vector.multi_reduction <maximumf>, %35, %cst_15 [1] : vector<8x8xf32> to vector<8xf32>
    %37 = vector.shape_cast %36 : vector<8xf32> to vector<8x1xf32>
    %38 = vector.broadcast %37 : vector<8x1xf32> to vector<8x8xf32>
    %39 = arith.subf %35, %38 : vector<8x8xf32>
    %40 = math.exp %39 : vector<8x8xf32>
    %cst_16 = arith.constant dense<0.000000e+00> : vector<8xf32>
    %41 = vector.multi_reduction <add>, %40, %cst_16 [1] : vector<8x8xf32> to vector<8xf32>
    %42 = vector.shape_cast %41 : vector<8xf32> to vector<8x1xf32>
    %43 = arith.truncf %40 : vector<8x8xf32> to vector<8x8xbf16>
    %cst_17 = arith.constant dense<0.000000e+00> : vector<8x8xf32>
    %44 = tpu.matmul %43, %34, %cst_17 {dimension_numbers = #tpu.dot_dimension_numbers<[1], [0], [0], [1], [0, 0, 1, 1], [], []>} : vector<8x8xbf16>, vector<8x8xbf16>, vector<8x8xf32> -> vector<8x8xf32>
    %45 = tpu.reciprocal %42 {approx = true} : vector<8x1xf32> -> vector<8x1xf32>
    %46 = vector.broadcast %45 : vector<8x1xf32> to vector<8x8xf32>
    %47 = arith.mulf %44, %46 : vector<8x8xf32>
    %48 = vector.extract_strided_slice %47 {offsets = [0, 0], sizes = [2, 8], strides = [1, 1]} : vector<8x8xf32> to vector<2x8xf32>
    %c2 = arith.constant 2 : index
    %c0_18 = arith.constant 0 : index
    %49 = vector.load %arg7[%c2, %c0_18] : memref<8x32xf32, #tpu.memory_space<vmem>>, vector<2x8xf32>
    tpu.vector_store %arg7[%c2, %c0_18], %48 {strides = array<i32>} : memref<8x32xf32, #tpu.memory_space<vmem>>, vector<2x8xf32>,
    %50 = vector.extract_strided_slice %47 {offsets = [2, 0], sizes = [2, 8], strides = [1, 1]} : vector<8x8xf32> to vector<2x8xf32>
    %c2_19 = arith.constant 2 : index
    %c8_20 = arith.constant 8 : index
    %51 = vector.load %arg7[%c2_19, %c8_20] : memref<8x32xf32, #tpu.memory_space<vmem>>, vector<2x8xf32>
    tpu.vector_store %arg7[%c2_19, %c8_20], %50 {strides = array<i32>} : memref<8x32xf32, #tpu.memory_space<vmem>>, vector<2x8xf32>,
    %52 = vector.extract_strided_slice %47 {offsets = [4, 0], sizes = [2, 8], strides = [1, 1]} : vector<8x8xf32> to vector<2x8xf32>
    %c2_21 = arith.constant 2 : index
    %c16_22 = arith.constant 16 : index
    %53 = vector.load %arg7[%c2_21, %c16_22] : memref<8x32xf32, #tpu.memory_space<vmem>>, vector<2x8xf32>
    tpu.vector_store %arg7[%c2_21, %c16_22], %52 {strides = array<i32>} : memref<8x32xf32, #tpu.memory_space<vmem>>, vector<2x8xf32>,
    %54 = vector.extract_strided_slice %47 {offsets = [6, 0], sizes = [2, 8], strides = [1, 1]} : vector<8x8xf32> to vector<2x8xf32>
    %c2_23 = arith.constant 2 : index
    %c24_24 = arith.constant 24 : index
    %55 = vector.load %arg7[%c2_23, %c24_24] : memref<8x32xf32, #tpu.memory_space<vmem>>, vector<2x8xf32>
    tpu.vector_store %arg7[%c2_23, %c24_24], %54 {strides = array<i32>} : memref<8x32xf32, #tpu.memory_space<vmem>>, vector<2x8xf32>,
    %56 = vector.extract_strided_slice %7 {offsets = [0, 16], sizes = [8, 8], strides = [1, 1]} : vector<8x96xbf16> to vector<8x8xbf16>
    %57 = vector.extract_strided_slice %7 {offsets = [0, 48], sizes = [8, 8], strides = [1, 1]} : vector<8x96xbf16> to vector<8x8xbf16>
    %58 = vector.extract_strided_slice %7 {offsets = [0, 80], sizes = [8, 8], strides = [1, 1]} : vector<8x96xbf16> to vector<8x8xbf16>
    %cst_25 = arith.constant dense<0.000000e+00> : vector<8x8xf32>
    %59 = tpu.matmul %56, %57, %cst_25 {dimension_numbers = #tpu.dot_dimension_numbers<[1], [1], [0], [0], [0, 0, 1, 0], [], []>} : vector<8x8xbf16>, vector<8x8xbf16>, vector<8x8xf32> -> vector<8x8xf32>
    %cst_26 = arith.constant dense<0xFF800000> : vector<8xf32>
    %60 = vector.multi_reduction <maximumf>, %59, %cst_26 [1] : vector<8x8xf32> to vector<8xf32>
    %61 = vector.shape_cast %60 : vector<8xf32> to vector<8x1xf32>
    %62 = vector.broadcast %61 : vector<8x1xf32> to vector<8x8xf32>
    %63 = arith.subf %59, %62 : vector<8x8xf32>
    %64 = math.exp %63 : vector<8x8xf32>
    %cst_27 = arith.constant dense<0.000000e+00> : vector<8xf32>
    %65 = vector.multi_reduction <add>, %64, %cst_27 [1] : vector<8x8xf32> to vector<8xf32>
    %66 = vector.shape_cast %65 : vector<8xf32> to vector<8x1xf32>
    %67 = arith.truncf %64 : vector<8x8xf32> to vector<8x8xbf16>
    %cst_28 = arith.constant dense<0.000000e+00> : vector<8x8xf32>
    %68 = tpu.matmul %67, %58, %cst_28 {dimension_numbers = #tpu.dot_dimension_numbers<[1], [0], [0], [1], [0, 0, 1, 1], [], []>} : vector<8x8xbf16>, vector<8x8xbf16>, vector<8x8xf32> -> vector<8x8xf32>
    %69 = tpu.reciprocal %66 {approx = true} : vector<8x1xf32> -> vector<8x1xf32>
    %70 = vector.broadcast %69 : vector<8x1xf32> to vector<8x8xf32>
    %71 = arith.mulf %68, %70 : vector<8x8xf32>
    %72 = vector.extract_strided_slice %71 {offsets = [0, 0], sizes = [2, 8], strides = [1, 1]} : vector<8x8xf32> to vector<2x8xf32>
    %c4 = arith.constant 4 : index
    %c0_29 = arith.constant 0 : index
    %73 = vector.load %arg7[%c4, %c0_29] : memref<8x32xf32, #tpu.memory_space<vmem>>, vector<2x8xf32>
    tpu.vector_store %arg7[%c4, %c0_29], %72 {strides = array<i32>} : memref<8x32xf32, #tpu.memory_space<vmem>>, vector<2x8xf32>,
    %74 = vector.extract_strided_slice %71 {offsets = [2, 0], sizes = [2, 8], strides = [1, 1]} : vector<8x8xf32> to vector<2x8xf32>
    %c4_30 = arith.constant 4 : index
    %c8_31 = arith.constant 8 : index
    %75 = vector.load %arg7[%c4_30, %c8_31] : memref<8x32xf32, #tpu.memory_space<vmem>>, vector<2x8xf32>
    tpu.vector_store %arg7[%c4_30, %c8_31], %74 {strides = array<i32>} : memref<8x32xf32, #tpu.memory_space<vmem>>, vector<2x8xf32>,
    %76 = vector.extract_strided_slice %71 {offsets = [4, 0], sizes = [2, 8], strides = [1, 1]} : vector<8x8xf32> to vector<2x8xf32>
    %c4_32 = arith.constant 4 : index
    %c16_33 = arith.constant 16 : index
    %77 = vector.load %arg7[%c4_32, %c16_33] : memref<8x32xf32, #tpu.memory_space<vmem>>, vector<2x8xf32>
    tpu.vector_store %arg7[%c4_32, %c16_33], %76 {strides = array<i32>} : memref<8x32xf32, #tpu.memory_space<vmem>>, vector<2x8xf32>,
    %78 = vector.extract_strided_slice %71 {offsets = [6, 0], sizes = [2, 8], strides = [1, 1]} : vector<8x8xf32> to vector<2x8xf32>
    %c4_34 = arith.constant 4 : index
    %c24_35 = arith.constant 24 : index
    %79 = vector.load %arg7[%c4_34, %c24_35] : memref<8x32xf32, #tpu.memory_space<vmem>>, vector<2x8xf32>
    tpu.vector_store %arg7[%c4_34, %c24_35], %78 {strides = array<i32>} : memref<8x32xf32, #tpu.memory_space<vmem>>, vector<2x8xf32>,
    %80 = vector.extract_strided_slice %7 {offsets = [0, 24], sizes = [8, 8], strides = [1, 1]} : vector<8x96xbf16> to vector<8x8xbf16>
    %81 = vector.extract_strided_slice %7 {offsets = [0, 56], sizes = [8, 8], strides = [1, 1]} : vector<8x96xbf16> to vector<8x8xbf16>
    %82 = vector.extract_strided_slice %7 {offsets = [0, 88], sizes = [8, 8], strides = [1, 1]} : vector<8x96xbf16> to vector<8x8xbf16>
    %cst_36 = arith.constant dense<0.000000e+00> : vector<8x8xf32>
    %83 = tpu.matmul %80, %81, %cst_36 {dimension_numbers = #tpu.dot_dimension_numbers<[1], [1], [0], [0], [0, 0, 1, 0], [], []>} : vector<8x8xbf16>, vector<8x8xbf16>, vector<8x8xf32> -> vector<8x8xf32>
    %cst_37 = arith.constant dense<0xFF800000> : vector<8xf32>
    %84 = vector.multi_reduction <maximumf>, %83, %cst_37 [1] : vector<8x8xf32> to vector<8xf32>
    %85 = vector.shape_cast %84 : vector<8xf32> to vector<8x1xf32>
    %86 = vector.broadcast %85 : vector<8x1xf32> to vector<8x8xf32>
    %87 = arith.subf %83, %86 : vector<8x8xf32>
    %88 = math.exp %87 : vector<8x8xf32>
    %cst_38 = arith.constant dense<0.000000e+00> : vector<8xf32>
    %89 = vector.multi_reduction <add>, %88, %cst_38 [1] : vector<8x8xf32> to vector<8xf32>
    %90 = vector.shape_cast %89 : vector<8xf32> to vector<8x1xf32>
    %91 = arith.truncf %88 : vector<8x8xf32> to vector<8x8xbf16>
    %cst_39 = arith.constant dense<0.000000e+00> : vector<8x8xf32>
    %92 = tpu.matmul %91, %82, %cst_39 {dimension_numbers = #tpu.dot_dimension_numbers<[1], [0], [0], [1], [0, 0, 1, 1], [], []>} : vector<8x8xbf16>, vector<8x8xbf16>, vector<8x8xf32> -> vector<8x8xf32>
    %93 = tpu.reciprocal %90 {approx = true} : vector<8x1xf32> -> vector<8x1xf32>
    %94 = vector.broadcast %93 : vector<8x1xf32> to vector<8x8xf32>
    %95 = arith.mulf %92, %94 : vector<8x8xf32>
    %96 = vector.extract_strided_slice %95 {offsets = [0, 0], sizes = [2, 8], strides = [1, 1]} : vector<8x8xf32> to vector<2x8xf32>
    %c6 = arith.constant 6 : index
    %c0_40 = arith.constant 0 : index
    %97 = vector.load %arg7[%c6, %c0_40] : memref<8x32xf32, #tpu.memory_space<vmem>>, vector<2x8xf32>
    tpu.vector_store %arg7[%c6, %c0_40], %96 {strides = array<i32>} : memref<8x32xf32, #tpu.memory_space<vmem>>, vector<2x8xf32>,
    %98 = vector.extract_strided_slice %95 {offsets = [2, 0], sizes = [2, 8], strides = [1, 1]} : vector<8x8xf32> to vector<2x8xf32>
    %c6_41 = arith.constant 6 : index
    %c8_42 = arith.constant 8 : index
    %99 = vector.load %arg7[%c6_41, %c8_42] : memref<8x32xf32, #tpu.memory_space<vmem>>, vector<2x8xf32>
    tpu.vector_store %arg7[%c6_41, %c8_42], %98 {strides = array<i32>} : memref<8x32xf32, #tpu.memory_space<vmem>>, vector<2x8xf32>,
    %100 = vector.extract_strided_slice %95 {offsets = [4, 0], sizes = [2, 8], strides = [1, 1]} : vector<8x8xf32> to vector<2x8xf32>
    %c6_43 = arith.constant 6 : index
    %c16_44 = arith.constant 16 : index
    %101 = vector.load %arg7[%c6_43, %c16_44] : memref<8x32xf32, #tpu.memory_space<vmem>>, vector<2x8xf32>
    tpu.vector_store %arg7[%c6_43, %c16_44], %100 {strides = array<i32>} : memref<8x32xf32, #tpu.memory_space<vmem>>, vector<2x8xf32>,
    %102 = vector.extract_strided_slice %95 {offsets = [6, 0], sizes = [2, 8], strides = [1, 1]} : vector<8x8xf32> to vector<2x8xf32>
    %c6_45 = arith.constant 6 : index
    %c24_46 = arith.constant 24 : index
    %103 = vector.load %arg7[%c6_45, %c24_46] : memref<8x32xf32, #tpu.memory_space<vmem>>, vector<2x8xf32>
    tpu.vector_store %arg7[%c6_45, %c24_46], %102 {strides = array<i32>} : memref<8x32xf32, #tpu.memory_space<vmem>>, vector<2x8xf32>,
    %c0_47 = arith.constant 0 : index
    %c0_48 = arith.constant 0 : index
    %104 = vector.load %arg7[%c0_47, %c0_48] : memref<8x32xf32, #tpu.memory_space<vmem>>, vector<8x32xf32>
    %105 = arith.truncf %104 : vector<8x32xf32> to vector<8x32xbf16>
    %c0_49 = arith.constant 0 : index
    %c0_50 = arith.constant 0 : index
    %106 = vector.load %arg4[%c0_49, %c0_50] : memref<32x32xbf16, #tpu.memory_space<vmem>>, vector<32x32xbf16>
    %cst_51 = arith.constant dense<0.000000e+00> : vector<8x32xf32>
    %107 = tpu.matmul %105, %106, %cst_51 {dimension_numbers = #tpu.dot_dimension_numbers<[1], [0], [0], [1], [0, 0, 1, 1], [], []>} : vector<8x32xbf16>, vector<32x32xbf16>, vector<8x32xf32> -> vector<8x32xf32>
    %c0_52 = arith.constant 0 : index
    %c0_53 = arith.constant 0 : index
    %108 = vector.load %arg5[%c0_52, %c0_53] : memref<1x32xf32, #tpu.memory_space<vmem>>, vector<1x32xf32>
    %109 = vector.broadcast %108 : vector<1x32xf32> to vector<8x32xf32>
    %110 = arith.addf %107, %109 : vector<8x32xf32>
    %c0_54 = arith.constant 0 : index
    %c0_55 = arith.constant 0 : index
    %111 = vector.load %arg6[%c0_54, %c0_55] : memref<8x32xf32, #tpu.memory_space<vmem>>, vector<8x32xf32>
    tpu.vector_store %arg6[%c0_54, %c0_55], %110 {strides = array<i32>} : memref<8x32xf32, #tpu.memory_space<vmem>>, vector<8x32xf32>,
    return
  }
  func.func @transform_0(%arg0: i32) -> (i32, i32) {
    %c0_i32 = arith.constant 0 : i32
    %c0_i32_0 = arith.constant 0 : i32
    return %arg0, %c0_i32 : i32, i32
  }
  func.func @transform_1(%arg0: i32) -> (i32, i32) {
    %c0_i32 = arith.constant 0 : i32
    %c0_i32_0 = arith.constant 0 : i32
    %c0_i32_1 = arith.constant 0 : i32
    return %c0_i32, %c0_i32_0 : i32, i32
  }
  func.func @transform_2(%arg0: i32) -> (i32, i32) {
    %c0_i32 = arith.constant 0 : i32
    %c0_i32_0 = arith.constant 0 : i32
    %c0_i32_1 = arith.constant 0 : i32
    return %c0_i32, %c0_i32_0 : i32, i32
  }
  func.func @transform_3(%arg0: i32) -> (i32, i32) {
    %c0_i32 = arith.constant 0 : i32
    %c0_i32_0 = arith.constant 0 : i32
    %c0_i32_1 = arith.constant 0 : i32
    return %c0_i32, %c0_i32_0 : i32, i32
  }
  func.func @transform_4(%arg0: i32) -> (i32, i32) {
    %c0_i32 = arith.constant 0 : i32
    %c0_i32_0 = arith.constant 0 : i32
    %c0_i32_1 = arith.constant 0 : i32
    return %c0_i32, %c0_i32_0 : i32, i32
  }
  func.func @transform_5(%arg0: i32) -> (i32, i32) {
    %c0_i32 = arith.constant 0 : i32
    %c0_i32_0 = arith.constant 0 : i32
    return %arg0, %c0_i32 : i32, i32
  }
}

</mosaic_0001>

<llo_original>
// kernel: tpu_custom_call.1
$region0: #{tpu_custom_call.1}
  #allocation0 [shape = 'u32[]', space=smem, size = 0x4, offset = 0x4, fixed_abs, tag = 'smem constant byte address 0x4 - core index']
  #allocation1 [shape = 'u32[144,128]{1,0:T(1,128)}', space=vmem, size = 0x12000, scoped, tag = 'internal scratch']
  #allocation2 [shape = 'f32[8,32]{1,0:T(8,128)}', space=vmem, size = 0x1000, scoped, tag = 'scratch operand']
  %s0 = inlined_call_operand.hbm [shape: f32[16,32], index: 0, kind: input, shape index: {}]
  %s1 = inlined_call_operand.hbm [shape: bf16[32,96], index: 1, kind: input, shape index: {}]
  %s2 = inlined_call_operand.vmem [shape: f32[1,96], index: 2, kind: input, shape index: {}]
  %s3 = inlined_call_operand.hbm [shape: bf16[32,32], index: 3, kind: input, shape index: {}]
  %s4 = inlined_call_operand.vmem [shape: f32[1,32], index: 4, kind: input, shape index: {}]
  %s5 = inlined_call_operand.hbm [shape: f32[16,32], index: 5, kind: output, shape index: {}]
  %s6 = sld [smem:[#allocation0]]
  $region65: #{tpu_custom_call.1} parent=0
    _
  %s8 = ssub.s32 1, %s6
  %s9 = scalar_select 0, %s8, %s6
  $region1: #{tpu_custom_call.1} parent=0
    #allocation3 [shape = 'u8[8192]{0}', space=vmem, size = 0x2000, scoped, tag = 'input window, operand 0']
    #allocation4 [shape = 's32[2]{0}', space=sflag, size = 0x8, scoped, tag = 'scoped memory for tpu_custom_call.1']
    #allocation5 [shape = 's32[2]{0}', space=sflag, size = 0x8, scoped, tag = 'scoped memory for tpu_custom_call.1']
    #allocation6 [shape = 'u8[8192]{0}', space=vmem, size = 0x2000, scoped, tag = 'input window, operand 1, single buffered']
    #allocation7 [shape = 's32[1]{0}', space=sflag, size = 0x4, scoped, tag = 'scoped memory for tpu_custom_call.1']
    #allocation8 [shape = 'u8[8192]{0}', space=vmem, size = 0x2000, scoped, tag = 'input window, operand 3, single buffered']
    #allocation9 [shape = 'u8[8192]{0}', space=vmem, size = 0x2000, scoped, tag = 'output window, operand 0']
    %10 = vsyncpa [#allocation4], 0
    %s11 = scalar_lea.sflag [#allocation4], 1
    %12 = vsyncpa %s11, 0
    %13 = vsyncpa [#allocation7], 0
    %14 = vsyncpa [#allocation5], 0
    %s15 = scalar_lea.sflag [#allocation5], 1
    %16 = vsyncpa %s15, 0
    loop: start=0, step=1, limit=4
    $region2: #{tpu_custom_call.1} parent=1 // loop_pre_header
      _
    $region3: #{tpu_custom_call.1} parent=1 // loop_header
      %s18 = sphi 0, %s22
      %p19 = scmp.ge.s32.totalorder %s18, 4
      %s28 = sphi 0, %s30
      %s31 = sphi 0, %s28
      %s32 = sphi 0, %s31
      %s48 = sphi 0, %s32
      %s52 = sphi 0, %s52
      %s54 = sphi 0, %s52
      %s55 = sphi 0, %s54
      %s69 = sphi 0, %s55
      %s73 = sphi 0, %s73
      %s75 = sphi 0, %s73
      %s76 = sphi 0, %s75
      %s90 = sphi 0, %s76
      %s94 = sphi 0, %s94
      %s96 = sphi 0, %s94
      %s97 = sphi 0, %s96
      %s111 = sphi 0, %s97
      %s115 = sphi 0, %s115
      %s117 = sphi 0, %s115
      %s118 = sphi 0, %s117
      %s132 = sphi 0, %s118
      %s138 = sphi 0, %s140
      %s141 = sphi 0, %s138
      %s142 = sphi 0, %s141
      %s158 = sphi 0, %s142
    $region4: #{tpu_custom_call.1} parent=1 // loop_header_branch
      %21 = sbr.rel (%p19) target = $region8
    $region5: #{tpu_custom_call.1} parent=1 // loop_body
      %s23 = ssub.s32 %s18, 1
      %s24 = ssub.s32 %s18, 2
      %s25 = sadd.s32 %s18, 1
      %s26 = ssub.s32 %s18, %s25
      %p27 = scmp.eq.s32.totalorder %s26, 0
      %s29 = sadd.s32 %s28, 1
      %s30 = scalar_select %p27, %s28, %s29
      %p33 = pneg %p27
      %p34 = scmp.eq.s32.totalorder %s18, 1
      %p35 = por %p33, %p34
      %p36 = scmp.ne.s32.totalorder %s28, %s31
      %p37 = scmp.eq.s32.totalorder %s18, 0
      %p38 = por %p36, %p37
      %p39 = scmp.ne.s32.totalorder %s28, %s31
      %p40 = scmp.eq.s32.totalorder %s23, 1
      %p41 = por %p39, %p40
      %p42 = scmp.ne.s32.totalorder %s31, %s32
      %p43 = scmp.eq.s32.totalorder %s23, 0
      %p44 = por %p42, %p43
      %p45 = scmp.ne.s32.totalorder %s31, %s32
      %p46 = scmp.eq.s32.totalorder %s24, 1
      %p47 = por %p45, %p46
      %p49 = scmp.ne.s32.totalorder %s32, %s48
      %p50 = scmp.eq.s32.totalorder %s24, 0
      %p51 = por %p49, %p50
      %s53 = sadd.s32 %s52, 1
      %p56 = scmp.eq.s32.totalorder %s18, 1
      %p57 = scmp.ne.s32.totalorder %s52, %s54
      %p58 = scmp.eq.s32.totalorder %s18, 0
      %p59 = por %p57, %p58
      %p60 = scmp.ne.s32.totalorder %s52, %s54
      %p61 = scmp.eq.s32.totalorder %s23, 1
      %p62 = por %p60, %p61
      %p63 = scmp.ne.s32.totalorder %s54, %s55
      %p64 = scmp.eq.s32.totalorder %s23, 0
      %p65 = por %p63, %p64
      %p66 = scmp.ne.s32.totalorder %s54, %s55
      %p67 = scmp.eq.s32.totalorder %s24, 1
      %p68 = por %p66, %p67
      %p70 = scmp.ne.s32.totalorder %s55, %s69
      %p71 = scmp.eq.s32.totalorder %s24, 0
      %p72 = por %p70, %p71
      %s74 = sadd.s32 %s73, 1
      %p77 = scmp.eq.s32.totalorder %s18, 1
      %p78 = scmp.ne.s32.totalorder %s73, %s75
      %p79 = scmp.eq.s32.totalorder %s18, 0
      %p80 = por %p78, %p79
      %p81 = scmp.ne.s32.totalorder %s73, %s75
      %p82 = scmp.eq.s32.totalorder %s23, 1
      %p83 = por %p81, %p82
      %p84 = scmp.ne.s32.totalorder %s75, %s76
      %p85 = scmp.eq.s32.totalorder %s23, 0
      %p86 = por %p84, %p85
      %p87 = scmp.ne.s32.totalorder %s75, %s76
      %p88 = scmp.eq.s32.totalorder %s24, 1
      %p89 = por %p87, %p88
      %p91 = scmp.ne.s32.totalorder %s76, %s90
      %p92 = scmp.eq.s32.totalorder %s24, 0
      %p93 = por %p91, %p92
      %s95 = sadd.s32 %s94, 1
      %p98 = scmp.eq.s32.totalorder %s18, 1
      %p99 = scmp.ne.s32.totalorder %s94, %s96
      %p100 = scmp.eq.s32.totalorder %s18, 0
      %p101 = por %p99, %p100
      %p102 = scmp.ne.s32.totalorder %s94, %s96
      %p103 = scmp.eq.s32.totalorder %s23, 1
      %p104 = por %p102, %p103
      %p105 = scmp.ne.s32.totalorder %s96, %s97
      %p106 = scmp.eq.s32.totalorder %s23, 0
      %p107 = por %p105, %p106
      %p108 = scmp.ne.s32.totalorder %s96, %s97
      %p109 = scmp.eq.s32.totalorder %s24, 1
      %p110 = por %p108, %p109
      %p112 = scmp.ne.s32.totalorder %s97, %s111
      %p113 = scmp.eq.s32.totalorder %s24, 0
      %p114 = por %p112, %p113
      %s116 = sadd.s32 %s115, 1
      %p119 = scmp.eq.s32.totalorder %s18, 1
      %p120 = scmp.ne.s32.totalorder %s115, %s117
      %p121 = scmp.eq.s32.totalorder %s18, 0
      %p122 = por %p120, %p121
      %p123 = scmp.ne.s32.totalorder %s115, %s117
      %p124 = scmp.eq.s32.totalorder %s23, 1
      %p125 = por %p123, %p124
      %p126 = scmp.ne.s32.totalorder %s117, %s118
      %p127 = scmp.eq.s32.totalorder %s23, 0
      %p128 = por %p126, %p127
      %p129 = scmp.ne.s32.totalorder %s117, %s118
      %p130 = scmp.eq.s32.totalorder %s24, 1
      %p131 = por %p129, %p130
      %p133 = scmp.ne.s32.totalorder %s118, %s132
      %p134 = scmp.eq.s32.totalorder %s24, 0
      %p135 = por %p133, %p134
      %s136 = ssub.s32 %s18, %s25
      %p137 = scmp.eq.s32.totalorder %s136, 0
      %s139 = sadd.s32 %s138, 1
      %s140 = scalar_select %p137, %s138, %s139
      %p143 = pneg %p137
      %p144 = scmp.eq.s32.totalorder %s18, 1
      %p145 = por %p143, %p144
      %p146 = scmp.ne.s32.totalorder %s138, %s141
      %p147 = scmp.eq.s32.totalorder %s18, 0
      %p148 = por %p146, %p147
      %p149 = scmp.ne.s32.totalorder %s138, %s141
      %p150 = scmp.eq.s32.totalorder %s23, 1
      %p151 = por %p149, %p150
      %p152 = scmp.ne.s32.totalorder %s141, %s142
      %p153 = scmp.eq.s32.totalorder %s23, 0
      %p154 = por %p152, %p153
      %p155 = scmp.ne.s32.totalorder %s141, %s142
      %p156 = scmp.eq.s32.totalorder %s24, 1
      %p157 = por %p155, %p156
      %p159 = scmp.ne.s32.totalorder %s142, %s158
      %p160 = scmp.eq.s32.totalorder %s24, 0
      %p161 = por %p159, %p160
      %p162 = scmp.le.s32.totalorder 1, %s18
      %p163 = scmp.lt.s32.totalorder %s18, 3
      %p164 = pnand %p162, %p163
      %p165 = pneg %p164
      // Predicated region
      $region9: #{tpu_custom_call.1} parent=5 // pred_check
        _
      $region10: #{tpu_custom_call.1} parent=5 // pred_check_branch
        %167 = sbr.rel (%p164) target = $region12
      $region11: #{tpu_custom_call.1} parent=5 // pred_region
        %s168 = ssub.s32 %s18, 1
        // Predicated region
        $region13: #{tpu_custom_call.1} parent=11 // pred_check
          %p169 = pneg %p65
        $region14: #{tpu_custom_call.1} parent=11 // pred_check_branch
          %171 = sbr.rel (%p169) target = $region16
        $region15: #{tpu_custom_call.1} parent=11 // pred_region
          %s173 = ssub.s32 256, 256
          %174 = vsyncadd [#allocation7], %s173
          %s175 = sshll.u32 [#allocation6], 4
          %s176 = int_to_ptr.vmem [resolvable:$true] %s175
          %181 = dma.hbm_to_vmem [thread:$0]  %s1, 256, %s176, [#allocation7], 64, 64, 4
        $region16: #{tpu_custom_call.1} parent=11 // pred_fallthru
          _
        // Predicated region
        $region17: #{tpu_custom_call.1} parent=11 // pred_check
          %p182 = pneg %p86
        $region18: #{tpu_custom_call.1} parent=11 // pred_check_branch
          %184 = sbr.rel (%p182) target = $region20
        $region19: #{tpu_custom_call.1} parent=11 // pred_region
          _
        $region20: #{tpu_custom_call.1} parent=11 // pred_fallthru
          _
        // Predicated region
        $region21: #{tpu_custom_call.1} parent=11 // pred_check
          %p185 = pneg %p107
        $region22: #{tpu_custom_call.1} parent=11 // pred_check_branch
          %187 = sbr.rel (%p185) target = $region24
        $region23: #{tpu_custom_call.1} parent=11 // pred_region
          %s189 = ssub.s32 256, 256
          %190 = vsyncadd [#allocation7], %s189
          %s191 = sshll.u32 [#allocation8], 4
          %s192 = int_to_ptr.vmem [resolvable:$true] %s191
          %197 = dma.hbm_to_vmem [thread:$0]  %s3, 256, %s192, [#allocation7], 64, 64, 4
        $region24: #{tpu_custom_call.1} parent=11 // pred_fallthru
          _
        // Predicated region
        $region25: #{tpu_custom_call.1} parent=11 // pred_check
          %p198 = pneg %p128
        $region26: #{tpu_custom_call.1} parent=11 // pred_check_branch
          %200 = sbr.rel (%p198) target = $region28
        $region27: #{tpu_custom_call.1} parent=11 // pred_region
          _
        $region28: #{tpu_custom_call.1} parent=11 // pred_fallthru
          _
      $region12: #{tpu_custom_call.1} parent=5 // pred_fallthru
        _
      %p201 = scmp.lt.s32.totalorder %s18, 2
      // Predicated region
      $region29: #{tpu_custom_call.1} parent=5 // pred_check
        %p202 = pneg %p201
      $region30: #{tpu_custom_call.1} parent=5 // pred_check_branch
        %204 = sbr.rel (%p202) target = $region32
      $region31: #{tpu_custom_call.1} parent=5 // pred_region
        // Predicated region
        $region33: #{tpu_custom_call.1} parent=31 // pred_check
          %p205 = pneg %p38
        $region34: #{tpu_custom_call.1} parent=31 // pred_check_branch
          %207 = sbr.rel (%p205) target = $region36
        $region35: #{tpu_custom_call.1} parent=31 // pred_region
          %s208 = sand.u32 %s28, 1
          %s209 = scalar_lea.sflag [#allocation4], %s208
          %s210 = sand.u32 %s28, 1
          %s211 = smul.addr %s210, 8
          %s212 = scalar_lea.vmem [#allocation3], %s211
          %s214 = ssub.s32 128, 128
          %215 = vsyncadd %s209, %s214
          %s216 = smul.addr %s18, 128
          %s217 = scalar_lea.hbm %s0, %s216
          %s219 = sshll.u32 %s212, 4
          %s220 = int_to_ptr.vmem [resolvable:$true] %s219
          %222 = dma.hbm_to_vmem [thread:$0]  %s217, 128, %s220, %s209
        $region36: #{tpu_custom_call.1} parent=31 // pred_fallthru
          _
      $region32: #{tpu_custom_call.1} parent=5 // pred_fallthru
        _
      %p223 = scmp.le.s32.totalorder 1, %s18
      %p224 = scmp.lt.s32.totalorder %s18, 3
      %p225 = pnand %p223, %p224
      %p226 = pneg %p225
      // Predicated region
      $region37: #{tpu_custom_call.1} parent=5 // pred_check
        _
      $region38: #{tpu_custom_call.1} parent=5 // pred_check_branch
        %228 = sbr.rel (%p225) target = $region40
      $region39: #{tpu_custom_call.1} parent=5 // pred_region
        %s229 = ssub.s32 %s18, 1
        %s230 = sand.u32 %s31, 1
        %s231 = scalar_lea.sflag [#allocation4], %s230
        %s232 = sand.u32 %s31, 1
        %s233 = smul.addr %s232, 8
        %s234 = scalar_lea.vmem [#allocation3], %s233
        // Predicated region
        $region41: #{tpu_custom_call.1} parent=39 // pred_check
          %p235 = pneg %p44
        $region42: #{tpu_custom_call.1} parent=39 // pred_check_branch
          %237 = sbr.rel (%p235) target = $region44
        $region43: #{tpu_custom_call.1} parent=39 // pred_region
          %238 = dma.done %s231, 128
        $region44: #{tpu_custom_call.1} parent=39 // pred_fallthru
          _
        // Predicated region
        $region45: #{tpu_custom_call.1} parent=39 // pred_check
          %p239 = pneg %p65
        $region46: #{tpu_custom_call.1} parent=39 // pred_check_branch
          %241 = sbr.rel (%p239) target = $region48
        $region47: #{tpu_custom_call.1} parent=39 // pred_region
          %242 = dma.done [#allocation7], 256
        $region48: #{tpu_custom_call.1} parent=39 // pred_fallthru
          _
        // Predicated region
        $region49: #{tpu_custom_call.1} parent=39 // pred_check
          %p243 = pneg %p107
        $region50: #{tpu_custom_call.1} parent=39 // pred_check_branch
          %245 = sbr.rel (%p243) target = $region52
        $region51: #{tpu_custom_call.1} parent=39 // pred_region
          %246 = dma.done [#allocation7], 256
        $region52: #{tpu_custom_call.1} parent=39 // pred_fallthru
          _
        %s247 = sand.u32 %s31, 1
        %s248 = scalar_lea.sflag [#allocation4], %s247
        %s249 = sand.u32 %s31, 1
        %s250 = smul.addr %s249, 8
        %s251 = scalar_lea.vmem [#allocation3], %s250
        %p252 = pneg %p44
        %p253 = pneg %p41
        %p254 = pneg %p65
        %p255 = pneg %p62
        %p256 = pneg %p86
        %p257 = pneg %p83
        %p258 = pneg %p107
        %p259 = pneg %p104
        %p260 = pneg %p128
        %p261 = pneg %p125
        %p262 = pneg %p154
        %p263 = pneg %p151
        %s264 = sand.u32 %s141, 1
        %s265 = scalar_lea.sflag [#allocation5], %s264
        %s266 = sand.u32 %s141, 1
        %s267 = smul.addr %s266, 8
        %s268 = scalar_lea.vmem [#allocation9], %s267
        %v270 = vld [vmem:[%s234] sm:$0xff]
        %v271 = vpack.c.bf16 %v270, %v270
        %v272 = vld [vmem:[#allocation6] sm:$0xf]
        %v273 = vld [vmem:[#allocation6 + $0x4] sm:$0xf]
        %v274 = vld [vmem:[#allocation6 + $0x8] sm:$0xf]
        %v275 = vld [vmem:[#allocation6 + $0xc] sm:$0xf]
        %v276 = vld [vmem:[%s2] sm:$0x1]
        %v278 = vlaneseq
        %v279 = vshrl.u32 %v278, 7
        %v280 = vsub.s32 0, %v279
        %v281 = vrot.slane %v276, %v280
        %v287 = vunpack.c.l.b16 %v272
        %v288 = vunpack.c.l.b16 %v273
        %v289 = vunpack.c.l.b16 %v274
        %v290 = vunpack.c.l.b16 %v275
        %v291 = vpack.c.b16 %v288, %v287
        %v292 = vpack.c.b16 %v290, %v289
        %vm295 = vcmask 261120
        %v297 = vsel %vm295, %v271, 0
        %299 = vmatprep.subr.bf16.mxu0 0
        %300 = vmatpush1.bf16.msra.mxu0 0
        %301 = vmatprep.subr.bf16.mxu0 0
        %302 = vmatpush1.bf16.msra.mxu0 0
        %303 = vmatprep.subr.bf16.mxu0 0
        %304 = vmatpush1.bf16.msra.mxu0 0
        %305 = vmatprep.subr.bf16.mxu0 0
        %306 = vmatpush1.bf16.msra.mxu0 0
        %307 = vmatprep.subr.bf16.mxu0 0
        %308 = vmatpush1.bf16.msra.mxu0 0
        %309 = vmatprep.subr.bf16.mxu0 0
        %310 = vmatpush1.bf16.msra.mxu0 0
        %311 = vmatprep.subr.bf16.mxu0 0
        %312 = vmatpush1.bf16.msra.mxu0 %v292
        %313 = vmatprep.subr.bf16.mxu0 0
        %314 = vmatpush1.bf16.msra.mxu0 %v291
        %315 = vmatprep.subr.bf16.mxu0 0
        %316 = vmatpush2.bf16.msra.mxu0 0
        %317 = vmatprep.subr.bf16.mxu0 0
        %318 = vmatpush2.bf16.msra.mxu0 0
        %319 = vmatprep.subr.bf16.mxu0 0
        %320 = vmatpush2.bf16.msra.mxu0 0
        %321 = vmatprep.subr.bf16.mxu0 0
        %322 = vmatpush2.bf16.msra.mxu0 0
        %323 = vmatprep.subr.bf16.mxu0 0
        %324 = vmatpush2.bf16.msra.mxu0 0
        %325 = vmatprep.subr.bf16.mxu0 0
        %326 = vmatpush2.bf16.msra.mxu0 0
        %327 = vmatprep.subr.bf16.mxu0 0
        %328 = vmatpush2.bf16.msra.mxu0 0
        %329 = vmatprep.subr.bf16.mxu0 0
        %330 = vmatpush2.bf16.msra.mxu0 0
        %331 = vmatprep.mubr.bf16.mxu0 0
        %332 = vmatmul.mubr.bf16.gmra.mxu0 %v297
        %v333 = vpop.f32.mrf.mxu0
        %v334 = vadd.f32 %v281, %v333
        %v335 = vpop.f32.mrf.mxu0
        %v336 = vpop.f32.mrf.mxu0
        %v337 = vpop.f32.mrf.mxu0
        %338 = vdwg.mxu0
        %v339 = vpack.c.bf16 %v334, %v334
        %341 = vrot.lane.b32.xlu0 %v339, 96
        %v342 = vpop.permute.xlu0 %341
        %vm343 = vcmask 64512
        %v345 = vsel %vm343, %v339, 0
        %v348 = vsel %vm343, %v342, 0
        %350 = vmatprep.subr.bf16.mxu0 0
        %351 = vmatpush1.bf16.xpose.msra.mxu0 0
        %352 = vmatprep.subr.bf16.mxu0 0
        %353 = vmatpush1.bf16.xpose.msra.mxu0 0
        %354 = vmatprep.subr.bf16.mxu0 0
        %355 = vmatpush1.bf16.xpose.msra.mxu0 0
        %356 = vmatprep.subr.bf16.mxu0 0
        %357 = vmatpush1.bf16.xpose.msra.mxu0 0
        %358 = vmatprep.subr.bf16.mxu0 0
        %359 = vmatpush1.bf16.xpose.msra.mxu0 0
        %360 = vmatprep.subr.bf16.mxu0 0
        %361 = vmatpush1.bf16.xpose.msra.mxu0 0
        %362 = vmatprep.subr.bf16.mxu0 0
        %363 = vmatpush1.bf16.xpose.msra.mxu0 0
        %364 = vmatprep.subr.bf16.mxu0 0
        %365 = vmatpush1.bf16.xpose.msra.mxu0 %v348
        %366 = vmatprep.subr.bf16.mxu0 0
        %367 = vmatpush2.bf16.xpose.msra.mxu0 0
        %368 = vmatprep.subr.bf16.mxu0 0
        %369 = vmatpush2.bf16.xpose.msra.mxu0 0
        %370 = vmatprep.subr.bf16.mxu0 0
        %371 = vmatpush2.bf16.xpose.msra.mxu0 0
        %372 = vmatprep.subr.bf16.mxu0 0
        %373 = vmatpush2.bf16.xpose.msra.mxu0 0
        %374 = vmatprep.subr.bf16.mxu0 0
        %375 = vmatpush2.bf16.xpose.msra.mxu0 0
        %376 = vmatprep.subr.bf16.mxu0 0
        %377 = vmatpush2.bf16.xpose.msra.mxu0 0
        %378 = vmatprep.subr.bf16.mxu0 0
        %379 = vmatpush2.bf16.xpose.msra.mxu0 0
        %380 = vmatprep.subr.bf16.mxu0 0
        %381 = vmatpush2.bf16.xpose.msra.mxu0 0
        %382 = vmatprep.mubr.bf16.mxu0 0
        %383 = vmatmul.mubr.bf16.gmra.mxu0 %v345
        %v384 = vpop.f32.mrf.mxu0
        %v385 = vadd.f32 0.0, %v384
        %v386 = vpop.f32.mrf.mxu0
        %v387 = vpop.f32.mrf.mxu0
        %v388 = vpop.f32.mrf.mxu0
        %389 = vdwg.mxu0
        %v390 = vsel %vm343, %v385, -inf
        %391 = vmax.xlane.f32.xlu0 %v390
        %v392 = vpop.xlane.xlu0 %391
        %v393 = vsub.f32 %v385, %v392
        %v394 = vmul.f32 %v393, 1.442695
        %v395 = vpow.pop %v394
        %v396 = vsel %vm343, %v395, 0.0
        %397 = vadd.xlane.f32.xlu0 %v396
        %v398 = vpop.xlane.xlu0 %397
        %v399 = vpack.c.bf16 %v395, %v395
        %400 = vrot.lane.b32.xlu0 %v339, 64
        %v401 = vpop.permute.xlu0 %400
        %v403 = vsel %vm343, %v399, 0
        %vm405 = vcmask 1043456
        %v407 = vsel %vm405, %v401, 0
        %409 = vmatprep.subr.bf16.mxu0 0
        %410 = vmatpush1.bf16.msra.mxu0 0
        %411 = vmatprep.subr.bf16.mxu0 0
        %412 = vmatpush1.bf16.msra.mxu0 0
        %413 = vmatprep.subr.bf16.mxu0 0
        %414 = vmatpush1.bf16.msra.mxu0 0
        %415 = vmatprep.subr.bf16.mxu0 0
        %416 = vmatpush1.bf16.msra.mxu0 0
        %417 = vmatprep.subr.bf16.mxu0 0
        %418 = vmatpush1.bf16.msra.mxu0 0
        %419 = vmatprep.subr.bf16.mxu0 0
        %420 = vmatpush1.bf16.msra.mxu0 0
        %421 = vmatprep.subr.bf16.mxu0 0
        %422 = vmatpush1.bf16.msra.mxu0 0
        %423 = vmatprep.subr.bf16.mxu0 0
        %424 = vmatpush1.bf16.msra.mxu0 %v407
        %425 = vmatprep.subr.bf16.mxu0 0
        %426 = vmatpush2.bf16.msra.mxu0 0
        %427 = vmatprep.subr.bf16.mxu0 0
        %428 = vmatpush2.bf16.msra.mxu0 0
        %429 = vmatprep.subr.bf16.mxu0 0
        %430 = vmatpush2.bf16.msra.mxu0 0
        %431 = vmatprep.subr.bf16.mxu0 0
        %432 = vmatpush2.bf16.msra.mxu0 0
        %433 = vmatprep.subr.bf16.mxu0 0
        %434 = vmatpush2.bf16.msra.mxu0 0
        %435 = vmatprep.subr.bf16.mxu0 0
        %436 = vmatpush2.bf16.msra.mxu0 0
        %437 = vmatprep.subr.bf16.mxu0 0
        %438 = vmatpush2.bf16.msra.mxu0 0
        %439 = vmatprep.subr.bf16.mxu0 0
        %440 = vmatpush2.bf16.msra.mxu0 0
        %441 = vmatprep.mubr.bf16.mxu0 0
        %442 = vmatmul.mubr.bf16.gmra.mxu0 %v403
        %v443 = vpop.f32.mrf.mxu0
        %v444 = vadd.f32 0.0, %v443
        %v445 = vpop.f32.mrf.mxu0
        %v446 = vpop.f32.mrf.mxu0
        %v447 = vpop.f32.mrf.mxu0
        %448 = vdwg.mxu0
        %v449 = vrcp.pop %v398
        %v450 = vmul.f32 %v444, %v449
        %vm451 = vcmask 58368
        %452 = vst.msk [vmem:[#allocation2] sm:$0x3] %vm451, %v450
        %454 = vrot.lane.b32.xlu0 %v450, 8
        %v455 = vpop.permute.xlu0 %454
        %vm457 = vcmask 126018
        %458 = vst.msk [vmem:[#allocation2 - $0x2] sm:$0xc] %vm457, %v455
        %459 = vrot.lane.b32.xlu0 %v450, 16
        %v460 = vpop.permute.xlu0 %459
        %vm462 = vcmask 193668
        %463 = vst.msk [vmem:[#allocation2 - $0x4] sm:$0x30] %vm462, %v460
        %464 = vrot.lane.b32.xlu0 %v450, 24
        %v465 = vpop.permute.xlu0 %464
        %vm467 = vcmask 261318
        %468 = vst.msk [vmem:[#allocation2 - $0x6] sm:$0xc0] %vm467, %v465
        %469 = vrot.lane.b32.xlu0 %v339, 120
        %v470 = vpop.permute.xlu0 %469
        %471 = vrot.lane.b32.xlu0 %v339, 88
        %v472 = vpop.permute.xlu0 %471
        %v474 = vsel %vm343, %v470, 0
        %v477 = vsel %vm343, %v472, 0
        %479 = vmatprep.subr.bf16.mxu0 0
        %480 = vmatpush1.bf16.xpose.msra.mxu0 0
        %481 = vmatprep.subr.bf16.mxu0 0
        %482 = vmatpush1.bf16.xpose.msra.mxu0 0
        %483 = vmatprep.subr.bf16.mxu0 0
        %484 = vmatpush1.bf16.xpose.msra.mxu0 0
        %485 = vmatprep.subr.bf16.mxu0 0
        %486 = vmatpush1.bf16.xpose.msra.mxu0 0
        %487 = vmatprep.subr.bf16.mxu0 0
        %488 = vmatpush1.bf16.xpose.msra.mxu0 0
        %489 = vmatprep.subr.bf16.mxu0 0
        %490 = vmatpush1.bf16.xpose.msra.mxu0 0
        %491 = vmatprep.subr.bf16.mxu0 0
        %492 = vmatpush1.bf16.xpose.msra.mxu0 0
        %493 = vmatprep.subr.bf16.mxu0 0
        %494 = vmatpush1.bf16.xpose.msra.mxu0 %v477
        %495 = vmatprep.subr.bf16.mxu0 0
        %496 = vmatpush2.bf16.xpose.msra.mxu0 0
        %497 = vmatprep.subr.bf16.mxu0 0
        %498 = vmatpush2.bf16.xpose.msra.mxu0 0
        %499 = vmatprep.subr.bf16.mxu0 0
        %500 = vmatpush2.bf16.xpose.msra.mxu0 0
        %501 = vmatprep.subr.bf16.mxu0 0
        %502 = vmatpush2.bf16.xpose.msra.mxu0 0
        %503 = vmatprep.subr.bf16.mxu0 0
        %504 = vmatpush2.bf16.xpose.msra.mxu0 0
        %505 = vmatprep.subr.bf16.mxu0 0
        %506 = vmatpush2.bf16.xpose.msra.mxu0 0
        %507 = vmatprep.subr.bf16.mxu0 0
        %508 = vmatpush2.bf16.xpose.msra.mxu0 0
        %509 = vmatprep.subr.bf16.mxu0 0
        %510 = vmatpush2.bf16.xpose.msra.mxu0 0
        %511 = vmatprep.mubr.bf16.mxu0 0
        %512 = vmatmul.mubr.bf16.gmra.mxu0 %v474
        %v513 = vpop.f32.mrf.mxu0
        %v514 = vadd.f32 0.0, %v513
        %v515 = vpop.f32.mrf.mxu0
        %v516 = vpop.f32.mrf.mxu0
        %v517 = vpop.f32.mrf.mxu0
        %518 = vdwg.mxu0
        %v519 = vsel %vm343, %v514, -inf
        %520 = vmax.xlane.f32.xlu0 %v519
        %v521 = vpop.xlane.xlu0 %520
        %v522 = vsub.f32 %v514, %v521
        %v523 = vmul.f32 %v522, 1.442695
        %v524 = vpow.pop %v523
        %v525 = vsel %vm343, %v524, 0.0
        %526 = vadd.xlane.f32.xlu0 %v525
        %v527 = vpop.xlane.xlu0 %526
        %v528 = vpack.c.bf16 %v524, %v524
        %529 = vrot.lane.b32.xlu0 %v339, 56
        %v530 = vpop.permute.xlu0 %529
        %v532 = vsel %vm343, %v528, 0
        %v535 = vsel %vm405, %v530, 0
        %537 = vmatprep.subr.bf16.mxu0 0
        %538 = vmatpush1.bf16.msra.mxu0 0
        %539 = vmatprep.subr.bf16.mxu0 0
        %540 = vmatpush1.bf16.msra.mxu0 0
        %541 = vmatprep.subr.bf16.mxu0 0
        %542 = vmatpush1.bf16.msra.mxu0 0
        %543 = vmatprep.subr.bf16.mxu0 0
        %544 = vmatpush1.bf16.msra.mxu0 0
        %545 = vmatprep.subr.bf16.mxu0 0
        %546 = vmatpush1.bf16.msra.mxu0 0
        %547 = vmatprep.subr.bf16.mxu0 0
        %548 = vmatpush1.bf16.msra.mxu0 0
        %549 = vmatprep.subr.bf16.mxu0 0
        %550 = vmatpush1.bf16.msra.mxu0 0
        %551 = vmatprep.subr.bf16.mxu0 0
        %552 = vmatpush1.bf16.msra.mxu0 %v535
        %553 = vmatprep.subr.bf16.mxu0 0
        %554 = vmatpush2.bf16.msra.mxu0 0
        %555 = vmatprep.subr.bf16.mxu0 0
        %556 = vmatpush2.bf16.msra.mxu0 0
        %557 = vmatprep.subr.bf16.mxu0 0
        %558 = vmatpush2.bf16.msra.mxu0 0
        %559 = vmatprep.subr.bf16.mxu0 0
        %560 = vmatpush2.bf16.msra.mxu0 0
        %561 = vmatprep.subr.bf16.mxu0 0
        %562 = vmatpush2.bf16.msra.mxu0 0
        %563 = vmatprep.subr.bf16.mxu0 0
        %564 = vmatpush2.bf16.msra.mxu0 0
        %565 = vmatprep.subr.bf16.mxu0 0
        %566 = vmatpush2.bf16.msra.mxu0 0
        %567 = vmatprep.subr.bf16.mxu0 0
        %568 = vmatpush2.bf16.msra.mxu0 0
        %569 = vmatprep.mubr.bf16.mxu0 0
        %570 = vmatmul.mubr.bf16.gmra.mxu0 %v532
        %v571 = vpop.f32.mrf.mxu0
        %v572 = vadd.f32 0.0, %v571
        %v573 = vpop.f32.mrf.mxu0
        %v574 = vpop.f32.mrf.mxu0
        %v575 = vpop.f32.mrf.mxu0
        %576 = vdwg.mxu0
        %v577 = vrcp.pop %v527
        %v578 = vmul.f32 %v572, %v577
        %579 = vst.msk [vmem:[#allocation2 + $0x2] sm:$0x3] %vm451, %v578
        %581 = vrot.lane.b32.xlu0 %v578, 8
        %v582 = vpop.permute.xlu0 %581
        %584 = vst.msk [vmem:[#allocation2] sm:$0xc] %vm457, %v582
        %585 = vrot.lane.b32.xlu0 %v578, 16
        %v586 = vpop.permute.xlu0 %585
        %588 = vst.msk [vmem:[#allocation2 - $0x2] sm:$0x30] %vm462, %v586
        %589 = vrot.lane.b32.xlu0 %v578, 24
        %v590 = vpop.permute.xlu0 %589
        %592 = vst.msk [vmem:[#allocation2 - $0x4] sm:$0xc0] %vm467, %v590
        %593 = vrot.lane.b32.xlu0 %v339, 112
        %v594 = vpop.permute.xlu0 %593
        %595 = vrot.lane.b32.xlu0 %v339, 80
        %v596 = vpop.permute.xlu0 %595
        %v598 = vsel %vm343, %v594, 0
        %v601 = vsel %vm343, %v596, 0
        %603 = vmatprep.subr.bf16.mxu0 0
        %604 = vmatpush1.bf16.xpose.msra.mxu0 0
        %605 = vmatprep.subr.bf16.mxu0 0
        %606 = vmatpush1.bf16.xpose.msra.mxu0 0
        %607 = vmatprep.subr.bf16.mxu0 0
        %608 = vmatpush1.bf16.xpose.msra.mxu0 0
        %609 = vmatprep.subr.bf16.mxu0 0
        %610 = vmatpush1.bf16.xpose.msra.mxu0 0
        %611 = vmatprep.subr.bf16.mxu0 0
        %612 = vmatpush1.bf16.xpose.msra.mxu0 0
        %613 = vmatprep.subr.bf16.mxu0 0
        %614 = vmatpush1.bf16.xpose.msra.mxu0 0
        %615 = vmatprep.subr.bf16.mxu0 0
        %616 = vmatpush1.bf16.xpose.msra.mxu0 0
        %617 = vmatprep.subr.bf16.mxu0 0
        %618 = vmatpush1.bf16.xpose.msra.mxu0 %v601
        %619 = vmatprep.subr.bf16.mxu0 0
        %620 = vmatpush2.bf16.xpose.msra.mxu0 0
        %621 = vmatprep.subr.bf16.mxu0 0
        %622 = vmatpush2.bf16.xpose.msra.mxu0 0
        %623 = vmatprep.subr.bf16.mxu0 0
        %624 = vmatpush2.bf16.xpose.msra.mxu0 0
        %625 = vmatprep.subr.bf16.mxu0 0
        %626 = vmatpush2.bf16.xpose.msra.mxu0 0
        %627 = vmatprep.subr.bf16.mxu0 0
        %628 = vmatpush2.bf16.xpose.msra.mxu0 0
        %629 = vmatprep.subr.bf16.mxu0 0
        %630 = vmatpush2.bf16.xpose.msra.mxu0 0
        %631 = vmatprep.subr.bf16.mxu0 0
        %632 = vmatpush2.bf16.xpose.msra.mxu0 0
        %633 = vmatprep.subr.bf16.mxu0 0
        %634 = vmatpush2.bf16.xpose.msra.mxu0 0
        %635 = vmatprep.mubr.bf16.mxu0 0
        %636 = vmatmul.mubr.bf16.gmra.mxu0 %v598
        %v637 = vpop.f32.mrf.mxu0
        %v638 = vadd.f32 0.0, %v637
        %v639 = vpop.f32.mrf.mxu0
        %v640 = vpop.f32.mrf.mxu0
        %v641 = vpop.f32.mrf.mxu0
        %642 = vdwg.mxu0
        %v643 = vsel %vm343, %v638, -inf
        %644 = vmax.xlane.f32.xlu0 %v643
        %v645 = vpop.xlane.xlu0 %644
        %v646 = vsub.f32 %v638, %v645
        %v647 = vmul.f32 %v646, 1.442695
        %v648 = vpow.pop %v647
        %v649 = vsel %vm343, %v648, 0.0
        %650 = vadd.xlane.f32.xlu0 %v649
        %v651 = vpop.xlane.xlu0 %650
        %v652 = vpack.c.bf16 %v648, %v648
        %653 = vrot.lane.b32.xlu0 %v339, 48
        %v654 = vpop.permute.xlu0 %653
        %v656 = vsel %vm343, %v652, 0
        %v659 = vsel %vm405, %v654, 0
        %661 = vmatprep.subr.bf16.mxu0 0
        %662 = vmatpush1.bf16.msra.mxu0 0
        %663 = vmatprep.subr.bf16.mxu0 0
        %664 = vmatpush1.bf16.msra.mxu0 0
        %665 = vmatprep.subr.bf16.mxu0 0
        %666 = vmatpush1.bf16.msra.mxu0 0
        %667 = vmatprep.subr.bf16.mxu0 0
        %668 = vmatpush1.bf16.msra.mxu0 0
        %669 = vmatprep.subr.bf16.mxu0 0
        %670 = vmatpush1.bf16.msra.mxu0 0
        %671 = vmatprep.subr.bf16.mxu0 0
        %672 = vmatpush1.bf16.msra.mxu0 0
        %673 = vmatprep.subr.bf16.mxu0 0
        %674 = vmatpush1.bf16.msra.mxu0 0
        %675 = vmatprep.subr.bf16.mxu0 0
        %676 = vmatpush1.bf16.msra.mxu0 %v659
        %677 = vmatprep.subr.bf16.mxu0 0
        %678 = vmatpush2.bf16.msra.mxu0 0
        %679 = vmatprep.subr.bf16.mxu0 0
        %680 = vmatpush2.bf16.msra.mxu0 0
        %681 = vmatprep.subr.bf16.mxu0 0
        %682 = vmatpush2.bf16.msra.mxu0 0
        %683 = vmatprep.subr.bf16.mxu0 0
        %684 = vmatpush2.bf16.msra.mxu0 0
        %685 = vmatprep.subr.bf16.mxu0 0
        %686 = vmatpush2.bf16.msra.mxu0 0
        %687 = vmatprep.subr.bf16.mxu0 0
        %688 = vmatpush2.bf16.msra.mxu0 0
        %689 = vmatprep.subr.bf16.mxu0 0
        %690 = vmatpush2.bf16.msra.mxu0 0
        %691 = vmatprep.subr.bf16.mxu0 0
        %692 = vmatpush2.bf16.msra.mxu0 0
        %693 = vmatprep.mubr.bf16.mxu0 0
        %694 = vmatmul.mubr.bf16.gmra.mxu0 %v656
        %v695 = vpop.f32.mrf.mxu0
        %v696 = vadd.f32 0.0, %v695
        %v697 = vpop.f32.mrf.mxu0
        %v698 = vpop.f32.mrf.mxu0
        %v699 = vpop.f32.mrf.mxu0
        %700 = vdwg.mxu0
        %v701 = vrcp.pop %v651
        %v702 = vmul.f32 %v696, %v701
        %703 = vst.msk [vmem:[#allocation2 + $0x4] sm:$0x3] %vm451, %v702
        %705 = vrot.lane.b32.xlu0 %v702, 8
        %v706 = vpop.permute.xlu0 %705
        %708 = vst.msk [vmem:[#allocation2 + $0x2] sm:$0xc] %vm457, %v706
        %709 = vrot.lane.b32.xlu0 %v702, 16
        %v710 = vpop.permute.xlu0 %709
        %712 = vst.msk [vmem:[#allocation2] sm:$0x30] %vm462, %v710
        %713 = vrot.lane.b32.xlu0 %v702, 24
        %v714 = vpop.permute.xlu0 %713
        %716 = vst.msk [vmem:[#allocation2 - $0x2] sm:$0xc0] %vm467, %v714
        %717 = vrot.lane.b32.xlu0 %v339, 104
        %v718 = vpop.permute.xlu0 %717
        %719 = vrot.lane.b32.xlu0 %v339, 72
        %v720 = vpop.permute.xlu0 %719
        %v722 = vsel %vm343, %v718, 0
        %v725 = vsel %vm343, %v720, 0
        %727 = vmatprep.subr.bf16.mxu0 0
        %728 = vmatpush1.bf16.xpose.msra.mxu0 0
        %729 = vmatprep.subr.bf16.mxu0 0
        %730 = vmatpush1.bf16.xpose.msra.mxu0 0
        %731 = vmatprep.subr.bf16.mxu0 0
        %732 = vmatpush1.bf16.xpose.msra.mxu0 0
        %733 = vmatprep.subr.bf16.mxu0 0
        %734 = vmatpush1.bf16.xpose.msra.mxu0 0
        %735 = vmatprep.subr.bf16.mxu0 0
        %736 = vmatpush1.bf16.xpose.msra.mxu0 0
        %737 = vmatprep.subr.bf16.mxu0 0
        %738 = vmatpush1.bf16.xpose.msra.mxu0 0
        %739 = vmatprep.subr.bf16.mxu0 0
        %740 = vmatpush1.bf16.xpose.msra.mxu0 0
        %741 = vmatprep.subr.bf16.mxu0 0
        %742 = vmatpush1.bf16.xpose.msra.mxu0 %v725
        %743 = vmatprep.subr.bf16.mxu0 0
        %744 = vmatpush2.bf16.xpose.msra.mxu0 0
        %745 = vmatprep.subr.bf16.mxu0 0
        %746 = vmatpush2.bf16.xpose.msra.mxu0 0
        %747 = vmatprep.subr.bf16.mxu0 0
        %748 = vmatpush2.bf16.xpose.msra.mxu0 0
        %749 = vmatprep.subr.bf16.mxu0 0
        %750 = vmatpush2.bf16.xpose.msra.mxu0 0
        %751 = vmatprep.subr.bf16.mxu0 0
        %752 = vmatpush2.bf16.xpose.msra.mxu0 0
        %753 = vmatprep.subr.bf16.mxu0 0
        %754 = vmatpush2.bf16.xpose.msra.mxu0 0
        %755 = vmatprep.subr.bf16.mxu0 0
        %756 = vmatpush2.bf16.xpose.msra.mxu0 0
        %757 = vmatprep.subr.bf16.mxu0 0
        %758 = vmatpush2.bf16.xpose.msra.mxu0 0
        %759 = vmatprep.mubr.bf16.mxu0 0
        %760 = vmatmul.mubr.bf16.gmra.mxu0 %v722
        %v761 = vpop.f32.mrf.mxu0
        %v762 = vadd.f32 0.0, %v761
        %v763 = vpop.f32.mrf.mxu0
        %v764 = vpop.f32.mrf.mxu0
        %v765 = vpop.f32.mrf.mxu0
        %766 = vdwg.mxu0
        %v767 = vsel %vm343, %v762, -inf
        %768 = vmax.xlane.f32.xlu0 %v767
        %v769 = vpop.xlane.xlu0 %768
        %v770 = vsub.f32 %v762, %v769
        %v771 = vmul.f32 %v770, 1.442695
        %v772 = vpow.pop %v771
        %v773 = vsel %vm343, %v772, 0.0
        %774 = vadd.xlane.f32.xlu0 %v773
        %v775 = vpop.xlane.xlu0 %774
        %v776 = vpack.c.bf16 %v772, %v772
        %777 = vrot.lane.b32.xlu0 %v339, 40
        %v778 = vpop.permute.xlu0 %777
        %v780 = vsel %vm343, %v776, 0
        %v783 = vsel %vm405, %v778, 0
        %785 = vmatprep.subr.bf16.mxu0 0
        %786 = vmatpush1.bf16.msra.mxu0 0
        %787 = vmatprep.subr.bf16.mxu0 0
        %788 = vmatpush1.bf16.msra.mxu0 0
        %789 = vmatprep.subr.bf16.mxu0 0
        %790 = vmatpush1.bf16.msra.mxu0 0
        %791 = vmatprep.subr.bf16.mxu0 0
        %792 = vmatpush1.bf16.msra.mxu0 0
        %793 = vmatprep.subr.bf16.mxu0 0
        %794 = vmatpush1.bf16.msra.mxu0 0
        %795 = vmatprep.subr.bf16.mxu0 0
        %796 = vmatpush1.bf16.msra.mxu0 0
        %797 = vmatprep.subr.bf16.mxu0 0
        %798 = vmatpush1.bf16.msra.mxu0 0
        %799 = vmatprep.subr.bf16.mxu0 0
        %800 = vmatpush1.bf16.msra.mxu0 %v783
        %801 = vmatprep.subr.bf16.mxu0 0
        %802 = vmatpush2.bf16.msra.mxu0 0
        %803 = vmatprep.subr.bf16.mxu0 0
        %804 = vmatpush2.bf16.msra.mxu0 0
        %805 = vmatprep.subr.bf16.mxu0 0
        %806 = vmatpush2.bf16.msra.mxu0 0
        %807 = vmatprep.subr.bf16.mxu0 0
        %808 = vmatpush2.bf16.msra.mxu0 0
        %809 = vmatprep.subr.bf16.mxu0 0
        %810 = vmatpush2.bf16.msra.mxu0 0
        %811 = vmatprep.subr.bf16.mxu0 0
        %812 = vmatpush2.bf16.msra.mxu0 0
        %813 = vmatprep.subr.bf16.mxu0 0
        %814 = vmatpush2.bf16.msra.mxu0 0
        %815 = vmatprep.subr.bf16.mxu0 0
        %816 = vmatpush2.bf16.msra.mxu0 0
        %817 = vmatprep.mubr.bf16.mxu0 0
        %818 = vmatmul.mubr.bf16.gmra.mxu0 %v780
        %v819 = vpop.f32.mrf.mxu0
        %v820 = vadd.f32 0.0, %v819
        %v821 = vpop.f32.mrf.mxu0
        %v822 = vpop.f32.mrf.mxu0
        %v823 = vpop.f32.mrf.mxu0
        %824 = vdwg.mxu0
        %v825 = vrcp.pop %v775
        %v826 = vmul.f32 %v820, %v825
        %827 = vst.msk [vmem:[#allocation2 + $0x6] sm:$0x3] %vm451, %v826
        %829 = vrot.lane.b32.xlu0 %v826, 8
        %v830 = vpop.permute.xlu0 %829
        %832 = vst.msk [vmem:[#allocation2 + $0x4] sm:$0xc] %vm457, %v830
        %833 = vrot.lane.b32.xlu0 %v826, 16
        %v834 = vpop.permute.xlu0 %833
        %836 = vst.msk [vmem:[#allocation2 + $0x2] sm:$0x30] %vm462, %v834
        %837 = vrot.lane.b32.xlu0 %v826, 24
        %v838 = vpop.permute.xlu0 %837
        %840 = vst.msk [vmem:[#allocation2] sm:$0xc0] %vm467, %v838
        %v841 = vld [vmem:[#allocation2] sm:$0xff]
        %v842 = vpack.c.bf16 %v841, %v841
        %v843 = vld [vmem:[#allocation8] sm:$0xf]
        %v844 = vld [vmem:[#allocation8 + $0x4] sm:$0xf]
        %v845 = vld [vmem:[#allocation8 + $0x8] sm:$0xf]
        %v846 = vld [vmem:[#allocation8 + $0xc] sm:$0xf]
        %v847 = vld [vmem:[%s4] sm:$0x1]
        %v849 = vlaneseq
        %v850 = vshrl.u32 %v849, 7
        %v851 = vsub.s32 0, %v850
        %v852 = vrot.slane %v847, %v851
        %v858 = vunpack.c.l.b16 %v843
        %v859 = vunpack.c.l.b16 %v844
        %v860 = vunpack.c.l.b16 %v845
        %v861 = vunpack.c.l.b16 %v846
        %v862 = vpack.c.b16 %v859, %v858
        %v863 = vpack.c.b16 %v861, %v860
        %v867 = vsel %vm295, %v842, 0
        %869 = vmatprep.subr.bf16.mxu0 0
        %870 = vmatpush1.bf16.msra.mxu0 0
        %871 = vmatprep.subr.bf16.mxu0 0
        %872 = vmatpush1.bf16.msra.mxu0 0
        %873 = vmatprep.subr.bf16.mxu0 0
        %874 = vmatpush1.bf16.msra.mxu0 0
        %875 = vmatprep.subr.bf16.mxu0 0
        %876 = vmatpush1.bf16.msra.mxu0 0
        %877 = vmatprep.subr.bf16.mxu0 0
        %878 = vmatpush1.bf16.msra.mxu0 0
        %879 = vmatprep.subr.bf16.mxu0 0
        %880 = vmatpush1.bf16.msra.mxu0 0
        %881 = vmatprep.subr.bf16.mxu0 0
        %882 = vmatpush1.bf16.msra.mxu0 %v863
        %883 = vmatprep.subr.bf16.mxu0 0
        %884 = vmatpush1.bf16.msra.mxu0 %v862
        %885 = vmatprep.subr.bf16.mxu0 0
        %886 = vmatpush2.bf16.msra.mxu0 0
        %887 = vmatprep.subr.bf16.mxu0 0
        %888 = vmatpush2.bf16.msra.mxu0 0
        %889 = vmatprep.subr.bf16.mxu0 0
        %890 = vmatpush2.bf16.msra.mxu0 0
        %891 = vmatprep.subr.bf16.mxu0 0
        %892 = vmatpush2.bf16.msra.mxu0 0
        %893 = vmatprep.subr.bf16.mxu0 0
        %894 = vmatpush2.bf16.msra.mxu0 0
        %895 = vmatprep.subr.bf16.mxu0 0
        %896 = vmatpush2.bf16.msra.mxu0 0
        %897 = vmatprep.subr.bf16.mxu0 0
        %898 = vmatpush2.bf16.msra.mxu0 0
        %899 = vmatprep.subr.bf16.mxu0 0
        %900 = vmatpush2.bf16.msra.mxu0 0
        %901 = vmatprep.mubr.bf16.mxu0 0
        %902 = vmatmul.mubr.bf16.gmra.mxu0 %v867
        %v903 = vpop.f32.mrf.mxu0
        %v904 = vadd.f32 %v852, %v903
        %v905 = vpop.f32.mrf.mxu0
        %v906 = vpop.f32.mrf.mxu0
        %v907 = vpop.f32.mrf.mxu0
        %908 = vdwg.mxu0
        %909 = vst.msk [vmem:[%s268] sm:$0xff] %vm295, %v904
        %s910 = sand.u32 %s141, 1
        %s911 = scalar_lea.sflag [#allocation5], %s910
        %s912 = sand.u32 %s141, 1
        %s913 = smul.addr %s912, 8
        %s914 = scalar_lea.vmem [#allocation9], %s913
        // Predicated region
        $region53: #{tpu_custom_call.1} parent=39 // pred_check
          %p915 = pneg %p151
        $region54: #{tpu_custom_call.1} parent=39 // pred_check_branch
          %917 = sbr.rel (%p915) target = $region56
        $region55: #{tpu_custom_call.1} parent=39 // pred_region
          %s919 = ssub.s32 128, 128
          %920 = vsyncadd %s911, %s919
          %s921 = smul.addr %s23, 128
          %s922 = scalar_lea.hbm %s5, %s921
          %s924 = sshll.u32 %s914, 4
          %s925 = int_to_ptr.vmem [resolvable:$true] %s924
          %927 = dma.vmem_to_hbm [thread:$0]  %s925, 128, %s922, %s911
        $region56: #{tpu_custom_call.1} parent=39 // pred_fallthru
          _
      $region40: #{tpu_custom_call.1} parent=5 // pred_fallthru
        _
      %p928 = scmp.le.s32.totalorder 2, %s18
      // Predicated region
      $region57: #{tpu_custom_call.1} parent=5 // pred_check
        %p929 = pneg %p928
      $region58: #{tpu_custom_call.1} parent=5 // pred_check_branch
        %931 = sbr.rel (%p929) target = $region60
      $region59: #{tpu_custom_call.1} parent=5 // pred_region
        %s932 = ssub.s32 %s18, 2
        // Predicated region
        $region61: #{tpu_custom_call.1} parent=59 // pred_check
          %p933 = pneg %p157
        $region62: #{tpu_custom_call.1} parent=59 // pred_check_branch
          %935 = sbr.rel (%p933) target = $region64
        $region63: #{tpu_custom_call.1} parent=59 // pred_region
          %s936 = sand.u32 %s142, 1
          %s937 = scalar_lea.sflag [#allocation5], %s936
          %s938 = sand.u32 %s142, 1
          %s939 = smul.addr %s938, 8
          %s940 = scalar_lea.vmem [#allocation9], %s939
          %941 = dma.done %s937, 128
        $region64: #{tpu_custom_call.1} parent=59 // pred_fallthru
          _
      $region60: #{tpu_custom_call.1} parent=5 // pred_fallthru
        _
    $region6: #{tpu_custom_call.1} parent=1 // loop_footer
      %s22 = sadd.s32 1, %s18
    $region7: #{tpu_custom_call.1} parent=1 // loop_footer_branch
      %17 = sbr.rel target = $region3
    $region8: #{tpu_custom_call.1} parent=1 // loop_exit
      _
    %942 = vsyncpa [#allocation4], 1
    %s943 = scalar_lea.sflag [#allocation4], 1
    %944 = vsyncpa %s943, 1
    %945 = vsyncpa [#allocation7], 1
    %946 = vsyncpa [#allocation5], 1
    %s947 = scalar_lea.sflag [#allocation5], 1
    %948 = vsyncpa %s947, 1

</llo_original>
